<compile_context>
chip_gen: v5e
topology: v5e:2x2
jax: 0.10.0
libtpu: 0.0.40
codegen_flags: <defaults>
</compile_context>

<pallas_src>
import math
import functools

import jax
import jax.numpy as jnp
from jax.experimental import pallas as pl
from jax.experimental.pallas import tpu as pltpu


# ---------------------------------------------------------------------------
# Kernels (operate on the lane-dense 2-D view [S, B*D])
# ---------------------------------------------------------------------------
def _pe_add_kernel(x_ref, pe_ref, o_ref):
    # x_ref: (TS, BD), pe_ref: (1, BD) -> broadcast-add over the sublane axis.
    o_ref[...] = (x_ref[...] + pe_ref[...]).astype(o_ref.dtype)


def _pe_add_dropout_kernel(x_ref, pe_ref, u_ref, o_ref, *, p):
    # Inverted dropout: keep with prob (1-p), scale kept values by 1/(1-p).
    y = x_ref[...] + pe_ref[...]
    keep = u_ref[...] >= jnp.float32(p)
    scale = jnp.asarray(1.0 / (1.0 - p), dtype=y.dtype)
    o_ref[...] = jnp.where(keep, y * scale, jnp.zeros_like(y)).astype(o_ref.dtype)


# ---------------------------------------------------------------------------
# Parameter (buffer) construction — deterministic, mirrors nn.Module __init__
# ---------------------------------------------------------------------------
def build_pe_table(d_model, max_len=512, dtype=jnp.float32):
    position = jnp.arange(max_len, dtype=jnp.float32)[:, None]              # (max_len, 1)
    div_term = jnp.exp(
        jnp.arange(0, d_model, 2, dtype=jnp.float32) * (-math.log(10000.0) / d_model)
    )                                                                        # (d_model/2,)
    pe = jnp.zeros((max_len, d_model), dtype=jnp.float32)
    pe = pe.at[:, 0::2].set(jnp.sin(position * div_term))
    pe = pe.at[:, 1::2].set(jnp.cos(position * div_term))
    return pe.astype(dtype)                                                  # (max_len, d_model)


# ---------------------------------------------------------------------------
# Tiling helper
# ---------------------------------------------------------------------------
def _pick_tile_rows(n_rows, row_bytes, target_bytes=2 * 1024 * 1024):
    """Rows per grid step: big enough to pipeline, small enough for VMEM.

    ~2 MiB per (double-buffered) tile keeps total VMEM well under the 32 MiB
    scoped limit even with x, out and the dropout randoms all in flight, and
    is large enough (>=512 rows for typical B*D) to sit near the HBM roofline.
    """
    ts = max(1, target_bytes // max(row_bytes, 1))
    ts = (ts // 8) * 8                      # multiple of 8 sublanes
    if ts < 8:
        ts = 8
    if ts >= n_rows:
        return int(n_rows)                  # full extent -> always a legal block
    return int(ts)


# ---------------------------------------------------------------------------
# Wrapper
# ---------------------------------------------------------------------------
def positional_encoding_forward(x, pe_table, *, p=0.1, training=False, rng=None):
    """x: [S, B, D]. Returns [S, B, D]. Mirrors PositionalEncoding.forward."""
    S, B, D = x.shape
    BD = B * D
    # Exact PyTorch semantics: pe[:, :x.size(1), :] slices the table by the
    # *batch* axis and broadcasts over the sequence axis.
    pe_slice = pe_table[:B, :].astype(x.dtype).reshape(1, BD)

    if training and p >= 1.0:               # guard degenerate threshold
        return jnp.zeros_like(x)

    # Lane-dense 2-D view: last axis B*D maps onto 128-wide lanes.
    x2d = x.reshape(S, BD)
    itemsize = jnp.dtype(x.dtype).itemsize
    ts = _pick_tile_rows(S, BD * itemsize)
    grid = (pl.cdiv(S, ts),)

    x_spec = pl.BlockSpec((ts, BD), lambda i: (i, 0))
    pe_spec = pl.BlockSpec((1, BD), lambda i: (0, 0))    # resident across steps
    out_spec = pl.BlockSpec((ts, BD), lambda i: (i, 0))

    compiler_params = pltpu.CompilerParams(
        dimension_semantics=("parallel",),               # shards over v7x's 2 TCs
        vmem_limit_bytes=32 * 1024 * 1024,               # explicit, fits v7x's 64 MiB
    )
    out_shape = jax.ShapeDtypeStruct((S, BD), x.dtype)

    if not training or p == 0.0:
        cost = pl.CostEstimate(
            flops=S * BD,
            transcendentals=0,
            bytes_accessed=(2 * S * BD + BD) * itemsize,
        )
        out2d = pl.pallas_call(
            _pe_add_kernel,
            out_shape=out_shape,
            grid_spec=pltpu.PrefetchScalarGridSpec(
                num_scalar_prefetch=0,
                grid=grid,
                in_specs=[x_spec, pe_spec],
                out_specs=out_spec,
            ),
            compiler_params=compiler_params,
            cost_estimate=cost,
            input_output_aliases={0: 0},                 # out aliases x's buffer
        )(x2d, pe_slice)
        return out2d.reshape(S, B, D)

    # Training path: dropout mask from uniform randoms streamed in as an input.
    # TODO(synk): on a real-TPU-only build, switch to the hardware PRNG
    # (pltpu.prng_seed(seed + pl.program_id(0)) + pltpu.prng_random_bits) to
    # avoid reading the S*B*D random tensor from HBM.
    if rng is None:
        rng = jax.random.PRNGKey(0)
    u = jax.random.uniform(rng, (S, BD), dtype=jnp.float32)
    u_spec = pl.BlockSpec((ts, BD), lambda i: (i, 0))
    cost = pl.CostEstimate(
        flops=3 * S * BD,
        transcendentals=0,
        bytes_accessed=(2 * S * BD + BD) * itemsize + S * BD * 4,
    )
    out2d = pl.pallas_call(
        functools.partial(_pe_add_dropout_kernel, p=float(p)),
        out_shape=out_shape,
        grid_spec=pltpu.PrefetchScalarGridSpec(
            num_scalar_prefetch=0,
            grid=grid,
            in_specs=[x_spec, pe_spec, u_spec],
            out_specs=out_spec,
        ),
        compiler_params=compiler_params,
        cost_estimate=cost,
        input_output_aliases={0: 0},
    )(x2d, pe_slice, u)
    return out2d.reshape(S, B, D)


# ---------------------------------------------------------------------------
# Main
# ---------------------------------------------------------------------------
if __name__ == "__main__":
    d_model = 32
    max_len = 512
    seq_len = 8
    batch = 4
    p_drop = 0.1

    key = jax.random.PRNGKey(0)
    kx, kdrop = jax.random.split(key)
    x = jax.random.normal(kx, (seq_len, batch, d_model), dtype=jnp.float32)

    pe_table = build_pe_table(d_model, max_len=max_len)

    # Eval-mode (deterministic) forward pass via the Pallas kernel.
    out = positional_encoding_forward(x, pe_table, p=p_drop, training=False)
    out = jax.block_until_ready(out)

    # Pure-JAX reference (eval mode): x + pe[:, :B, :] broadcast over S.
    ref = x + pe_table[:batch, :][None, :, :]
    assert out.shape == (seq_len, batch, d_model)
    assert jnp.allclose(out, ref, atol=1e-6, rtol=1e-6)

    # Training-mode (dropout) kernel: kept entries == ref/(1-p), dropped == 0.
    out_train = positional_encoding_forward(
        x, pe_table, p=p_drop, training=True, rng=kdrop
    )
    out_train = jax.block_until_ready(out_train)
    assert out_train.shape == (seq_len, batch, d_model)
    keep_mask = out_train != 0
    assert jnp.allclose(
        jnp.where(keep_mask, out_train * (1.0 - p_drop), 0.0),
        jnp.where(keep_mask, ref, 0.0),
        atol=1e-5, rtol=1e-5,
    )

    print("KERNEL_OK")
</pallas_src>

<mosaic_0001>
module attributes {stable_mosaic.version = 11 : i64} {
  func.func @_pe_add_kernel(%arg0: i32, %arg1: memref<8x128xf32, #tpu.memory_space<vmem>>, %arg2: memref<1x128xf32, #tpu.memory_space<vmem>>, %arg3: memref<8x128xf32, #tpu.memory_space<vmem>>) attributes {dimension_semantics = [#tpu.dimension_semantics<parallel>], iteration_bounds = array<i64: 1>, scalar_prefetch = 0 : i64, scratch_operands = 0 : i64, tpu.core_type = #tpu.core_type<tc>, window_params = [{transform_indices = @transform_0, window_bounds = array<i64: 8, 128>}, {pipeline_mode = #tpu.pipeline_mode<synchronous>, transform_indices = @transform_1, window_bounds = array<i64: 1, 128>}, {transform_indices = @transform_2, window_bounds = array<i64: 8, 128>}]} {
    %c0 = arith.constant 0 : index
    %c0_0 = arith.constant 0 : index
    %0 = vector.load %arg1[%c0, %c0_0] : memref<8x128xf32, #tpu.memory_space<vmem>>, vector<8x128xf32>
    %c0_1 = arith.constant 0 : index
    %c0_2 = arith.constant 0 : index
    %1 = vector.load %arg2[%c0_1, %c0_2] : memref<1x128xf32, #tpu.memory_space<vmem>>, vector<1x128xf32>
    %2 = vector.broadcast %1 : vector<1x128xf32> to vector<8x128xf32>
    %3 = arith.addf %0, %2 : vector<8x128xf32>
    %c0_3 = arith.constant 0 : index
    %c0_4 = arith.constant 0 : index
    %4 = vector.load %arg3[%c0_3, %c0_4] : memref<8x128xf32, #tpu.memory_space<vmem>>, vector<8x128xf32>
    tpu.vector_store %arg3[%c0_3, %c0_4], %3 {strides = array<i32>} : memref<8x128xf32, #tpu.memory_space<vmem>>, vector<8x128xf32>,
    return
  }
  func.func @transform_0(%arg0: i32) -> (i32, i32) {
    %c0_i32 = arith.constant 0 : i32
    %c0_i32_0 = arith.constant 0 : i32
    return %arg0, %c0_i32 : i32, i32
  }
  func.func @transform_1(%arg0: i32) -> (i32, i32) {
    %c0_i32 = arith.constant 0 : i32
    %c0_i32_0 = arith.constant 0 : i32
    %c0_i32_1 = arith.constant 0 : i32
    return %c0_i32, %c0_i32_0 : i32, i32
  }
  func.func @transform_2(%arg0: i32) -> (i32, i32) {
    %c0_i32 = arith.constant 0 : i32
    %c0_i32_0 = arith.constant 0 : i32
    return %arg0, %c0_i32 : i32, i32
  }
}

</mosaic_0001>

<llo_original>
// kernel: tpu_custom_call.1
$region0: #{tpu_custom_call.1}
  #allocation0 [shape = 'u32[]', space=smem, size = 0x4, offset = 0x4, fixed_abs, tag = 'smem constant byte address 0x4 - core index']
  #allocation1 [shape = 'u32[72,128]{1,0:T(1,128)}', space=vmem, size = 0x9000, scoped, tag = 'internal scratch']
  %s0 = inlined_call_operand.hbm [shape: f32[8,128], index: 0, kind: input, shape index: {}, may-alias: {0,2}]
  %s1 = inlined_call_operand.vmem [shape: f32[1,128], index: 1, kind: input, shape index: {}]
  %s2 = inlined_call_operand.hbm [shape: f32[8,128], index: 2, kind: output, shape index: {}, may-alias: {0,2}]
  %s3 = sld [smem:[#allocation0]]
  $region22: #{tpu_custom_call.1} parent=0
    _
  %s5 = ssub.s32 1, %s3
  %s6 = scalar_select 0, %s5, %s3
  $region1: #{tpu_custom_call.1} parent=0
    #allocation2 [shape = 'u8[4096]{0}', space=vmem, size = 0x1000, scoped, tag = 'input window, operand 0, single buffered']
    #allocation3 [shape = 's32[1]{0}', space=sflag, size = 0x4, scoped, tag = 'scoped memory for tpu_custom_call.1']
    #allocation4 [shape = 's32[1]{0}', space=sflag, size = 0x4, scoped, tag = 'scoped memory for tpu_custom_call.1']
    #allocation5 [shape = 'u8[4096]{0}', space=vmem, size = 0x1000, scoped, tag = 'output window, operand 0, single buffered']
    %7 = vsyncpa [#allocation3], 0
    %8 = vsyncpa [#allocation4], 0
    // Predicated region
    $region2: #{tpu_custom_call.1} parent=1 // pred_check
      _
    $region3: #{tpu_custom_call.1} parent=1 // pred_check_branch
      %10 = sbr.rel (0) target = $region5
    $region4: #{tpu_custom_call.1} parent=1 // pred_region
      %12 = vsyncadd [#allocation3], 0
      %s14 = sshll.u32 %s0, 4
      %s15 = int_to_ptr.hbm [resolvable:$true] %s14
      %s16 = sshll.u32 [#allocation2], 4
      %s17 = int_to_ptr.vmem [resolvable:$true] %s16
      %19 = dma.hbm_to_vmem [thread:$0]  %s15, 128, %s17, [#allocation3]
    $region5: #{tpu_custom_call.1} parent=1 // pred_fallthru
      _
    // Predicated region
    $region6: #{tpu_custom_call.1} parent=1 // pred_check
      _
    $region7: #{tpu_custom_call.1} parent=1 // pred_check_branch
      %21 = sbr.rel (0) target = $region9
    $region8: #{tpu_custom_call.1} parent=1 // pred_region
      _
    $region9: #{tpu_custom_call.1} parent=1 // pred_fallthru
      _
    // Predicated region
    $region10: #{tpu_custom_call.1} parent=1 // pred_check
      _
    $region11: #{tpu_custom_call.1} parent=1 // pred_check_branch
      %23 = sbr.rel (0) target = $region13
    $region12: #{tpu_custom_call.1} parent=1 // pred_region
      %25 = dma.done [#allocation3], 128
    $region13: #{tpu_custom_call.1} parent=1 // pred_fallthru
      _
    %v26 = vld [vmem:[#allocation2] sm:$0xff]
    %v27 = vld [vmem:[%s1] sm:$0x1]
    %v29 = vperm.slane %v27, 0
    %v31 = vadd.f32 %v26, %v29
    %32 = vst [vmem:[#allocation5] sm:$0xff] %v31
    // Predicated region
    $region14: #{tpu_custom_call.1} parent=1 // pred_check
      _
    $region15: #{tpu_custom_call.1} parent=1 // pred_check_branch
      %34 = sbr.rel (0) target = $region17
    $region16: #{tpu_custom_call.1} parent=1 // pred_region
      %36 = vsyncadd [#allocation4], 0
      %s38 = sshll.u32 [#allocation5], 4
      %s39 = int_to_ptr.vmem [resolvable:$true] %s38
      %s40 = sshll.u32 %s2, 4
      %s41 = int_to_ptr.hbm [resolvable:$true] %s40
      %43 = dma.vmem_to_hbm [thread:$0]  %s39, 128, %s41, [#allocation4]
    $region17: #{tpu_custom_call.1} parent=1 // pred_fallthru
      _
    // Predicated region
    $region18: #{tpu_custom_call.1} parent=1 // pred_check
      _
    $region19: #{tpu_custom_call.1} parent=1 // pred_check_branch
      %45 = sbr.rel (0) target = $region21
    $region20: #{tpu_custom_call.1} parent=1 // pred_region
      %47 = dma.done [#allocation4], 128
    $region21: #{tpu_custom_call.1} parent=1 // pred_fallthru
      _
    %48 = vsyncpa [#allocation3], 1
    %49 = vsyncpa [#allocation4], 1

</llo_original>
